<compile_context>
chip_gen: v7x
topology: tpu7x:2x2x1
jax: 0.10.0
libtpu: 0.0.40
codegen_flags: <defaults>
</compile_context>

<pallas_src>
import functools

import jax
import jax.numpy as jnp
from jax.experimental import pallas as pl
from jax.experimental.pallas import tpu as pltpu

IN_FEATURES = 1000  # fixed by the module definition (nn.Linear(1000, ...))
LANES = 128
TM_MAX = 1024       # f32 x double-buffer at 1024 rows ~= 8 MiB (< v5e 16 MiB)
SMALL_BATCH = 64    # below this, plain fused XLA beats a Pallas launch


# --------------------------------------------------------------------------
# Kernel
# --------------------------------------------------------------------------
def _fused_affine_kernel(x_ref, w_ref, b_ref, out_ref):
    """out = x @ W + b : one MXU matmul + bias + one lane-dense full store.

    x_ref   : (TM, 1000)    f32   (cast to bf16 in VMEM, under the DMA)
    w_ref   : (1000, Npad)  bf16  (grid-resident: index_map is constant)
    b_ref   : (1, Npad)     f32   (grid-resident)
    out_ref : (TM, Npad)    f32
    """
    x_bf = x_ref[...].astype(jnp.bfloat16)            # VPU cast, hidden under DMA
    acc = jnp.dot(x_bf, w_ref[...], preferred_element_type=jnp.float32)
    out_ref[...] = (acc + b_ref[...]).astype(out_ref.dtype)


# --------------------------------------------------------------------------
# One-time parameter preprocessing (NOT in the per-forward path)
# --------------------------------------------------------------------------
def prepare_params(w1, b1, w2, b2, *, compute_dtype=jnp.bfloat16):
    """Fold the two linears into a single affine map.

    w1 : (n1, 1000), b1 : (n1,)          -- PyTorch Linear layout (out, in)
    w2 : (n2, 1000+n1), b2 : (n2,)

    Returns (w_fused, b_fused, n_out):
      w_fused : (1000, Npad)  compute_dtype  (Npad = round_up(n1+n2, 128))
      b_fused : (1, Npad)     float32
      n_out   : n1 + n2
    """
    n1 = w1.shape[0]
    n2 = w2.shape[0]
    n_out = n1 + n2
    n_pad = ((n_out + LANES - 1) // LANES) * LANES

    w1_t = w1.astype(jnp.float32).T                     # (1000, n1)
    w2x_t = w2[:, :IN_FEATURES].astype(jnp.float32).T   # (1000, n2)
    w2h_t = w2[:, IN_FEATURES:].astype(jnp.float32).T   # (n1,   n2)

    # Fold (all in f32):  out = x @ [W1 | W2x + W1@W2h] + [b1 | b2 + b1@W2h]
    w_x2 = w2x_t + w1_t @ w2h_t                         # (1000, n2)
    b_x2 = b2.astype(jnp.float32) + b1.astype(jnp.float32) @ w2h_t

    w_fused = jnp.concatenate([w1_t, w_x2], axis=1)     # (1000, n1+n2)
    b_fused = jnp.concatenate([b1.astype(jnp.float32), b_x2])

    # Pad output axis to a full 128-lane multiple (lane-dense stores).
    w_fused = jnp.pad(w_fused, ((0, 0), (0, n_pad - n_out)))
    b_fused = jnp.pad(b_fused, (0, n_pad - n_out))

    return w_fused.astype(compute_dtype), b_fused.reshape(1, n_pad), n_out


# --------------------------------------------------------------------------
# Tile selection
# --------------------------------------------------------------------------
def _select_tm(B):
    """Batch-tile size: big (amortize ~0.35us/step), 8-aligned, >=2 steps
    when splittable (v7x dual TensorCore), divides B evenly when possible."""
    if B <= TM_MAX:
        if B >= 16 and (B // 2) % 8 == 0:
            return B // 2          # two grid steps -> both v7x TCs get work
        return B                   # single tile (block == full array dim)
    # Large batch: largest 8-aligned tile in [512, 1024] that divides B.
    for tm in range(TM_MAX, 511, -8):
        if B % tm == 0:
            return tm
    return TM_MAX                  # partial last block (Pallas masks it)


# --------------------------------------------------------------------------
# Forward paths
# --------------------------------------------------------------------------
@functools.partial(jax.jit, static_argnames=("n_out", "return_padded"))
def _pallas_forward(x, w_fused, b_fused, n_out, return_padded=False):
    B, in_feat = x.shape
    assert in_feat == IN_FEATURES
    n_pad = w_fused.shape[1]

    TM = _select_tm(B)
    grid = (pl.cdiv(B, TM),)

    out_padded = pl.pallas_call(
        _fused_affine_kernel,
        out_shape=jax.ShapeDtypeStruct((B, n_pad), jnp.float32),
        grid=grid,
        in_specs=[
            pl.BlockSpec((TM, IN_FEATURES), lambda i: (i, 0)),     # x tile (f32)
            pl.BlockSpec((IN_FEATURES, n_pad), lambda i: (0, 0)),  # W resident
            pl.BlockSpec((1, n_pad), lambda i: (0, 0)),            # b resident
        ],
        out_specs=pl.BlockSpec((TM, n_pad), lambda i: (i, 0)),
        compiler_params=pltpu.CompilerParams(
            dimension_semantics=("parallel",)),
    )(x, w_fused, b_fused)

    if return_padded:
        return out_padded           # consumer slices/fuses [:, :n_out] itself
    return out_padded[:, :n_out]


@functools.partial(jax.jit, static_argnames=("n_out",))
def _small_batch_forward(x, w_fused, b_fused, n_out):
    """Plain fused XLA affine for tiny batches (launch overhead dominates)."""
    acc = jnp.dot(x.astype(w_fused.dtype), w_fused,
                  preferred_element_type=jnp.float32)
    return (acc + b_fused)[:, :n_out]


def two_level_forward(x, w_fused, b_fused, n_out, *,
                      use_pallas=None, return_padded=False):
    """Forward pass. x: (B, 1000) float32 -> (B, n_out) float32."""
    B = x.shape[0]
    if use_pallas is None:
        use_pallas = B > SMALL_BATCH
    if use_pallas:
        return _pallas_forward(x, w_fused, b_fused, n_out,
                               return_padded=return_padded)
    return _small_batch_forward(x, w_fused, b_fused, n_out)


# --------------------------------------------------------------------------
# Pure-JAX f32 reference mirroring the PyTorch module exactly
# --------------------------------------------------------------------------
def reference_forward(x, w1, b1, w2, b2):
    x1 = x @ w1.T + b1
    x2 = jnp.concatenate([x, x1], axis=1) @ w2.T + b2
    return jnp.concatenate([x1, x2], axis=1)


if __name__ == "__main__":
    IN = IN_FEATURES               # 1000, fixed by the module definition
    N1 = 16                        # num_lev1_categories
    N2 = 32                        # num_lev2_categories
    B = 128                        # exercises the Pallas path with 2 grid steps

    key = jax.random.PRNGKey(0)
    kx, kw1, kb1, kw2, kb2 = jax.random.split(key, 5)

    x = jax.random.normal(kx, (B, IN), dtype=jnp.float32)

    # Deterministic parameter init (PyTorch-Linear-style uniform bounds).
    bound1 = 1.0 / jnp.sqrt(IN)
    w1 = jax.random.uniform(kw1, (N1, IN), jnp.float32, -bound1, bound1)
    b1 = jax.random.uniform(kb1, (N1,), jnp.float32, -bound1, bound1)

    bound2 = 1.0 / jnp.sqrt(IN + N1)
    w2 = jax.random.uniform(kw2, (N2, IN + N1), jnp.float32, -bound2, bound2)
    b2 = jax.random.uniform(kb2, (N2,), jnp.float32, -bound2, bound2)

    # One-time setup (hoisted out of the per-call path).
    w_fused, b_fused, n_out = prepare_params(w1, b1, w2, b2)
    w_fused, b_fused = jax.block_until_ready((w_fused, b_fused))

    ref = reference_forward(x, w1, b1, w2, b2)

    # --- Pallas path (forced; B=128 > SMALL_BATCH anyway) -------------------
    out = two_level_forward(x, w_fused, b_fused, n_out, use_pallas=True)
    out = jax.block_until_ready(out)
    assert out.shape == (B, N1 + N2), out.shape
    # bf16 weights + in-kernel bf16 x cast (f32 accumulation) -> loose tol.
    assert jnp.allclose(out, ref, atol=2e-2, rtol=2e-2), "pallas mismatch"

    # --- Small-batch fallback path (plain fused XLA affine) -----------------
    xs = x[:8]
    out_s = jax.block_until_ready(
        two_level_forward(xs, w_fused, b_fused, n_out))
    assert out_s.shape == (8, N1 + N2), out_s.shape
    assert jnp.allclose(out_s, ref[:8], atol=2e-2, rtol=2e-2), "fallback mismatch"

    print("KERNEL_OK")
</pallas_src>

<mosaic_0001>
module attributes {stable_mosaic.version = 11 : i64} {
  func.func @_fused_affine_kernel(%arg0: i32, %arg1: memref<64x1000xf32, #tpu.memory_space<vmem>>, %arg2: memref<1000x128xbf16, #tpu.memory_space<vmem>>, %arg3: memref<1x128xf32, #tpu.memory_space<vmem>>, %arg4: memref<64x128xf32, #tpu.memory_space<vmem>>) attributes {dimension_semantics = [#tpu.dimension_semantics<parallel>], iteration_bounds = array<i64: 2>, scalar_prefetch = 0 : i64, scratch_operands = 0 : i64, tpu.core_type = #tpu.core_type<tc>, window_params = [{transform_indices = @transform_0, window_bounds = array<i64: 64, 1000>}, {pipeline_mode = #tpu.pipeline_mode<synchronous>, transform_indices = @transform_1, window_bounds = array<i64: 1000, 128>}, {pipeline_mode = #tpu.pipeline_mode<synchronous>, transform_indices = @transform_2, window_bounds = array<i64: 1, 128>}, {transform_indices = @transform_3, window_bounds = array<i64: 64, 128>}]} {
    %c0 = arith.constant 0 : index
    %c0_0 = arith.constant 0 : index
    %0 = vector.load %arg1[%c0, %c0_0] : memref<64x1000xf32, #tpu.memory_space<vmem>>, vector<64x1000xf32>
    %1 = arith.truncf %0 : vector<64x1000xf32> to vector<64x1000xbf16>
    %c0_1 = arith.constant 0 : index
    %c0_2 = arith.constant 0 : index
    %2 = vector.load %arg2[%c0_1, %c0_2] : memref<1000x128xbf16, #tpu.memory_space<vmem>>, vector<1000x128xbf16>
    %cst = arith.constant dense<0.000000e+00> : vector<64x128xf32>
    %3 = tpu.matmul %1, %2, %cst {dimension_numbers = #tpu.dot_dimension_numbers<[1], [0], [0], [1], [0, 0, 1, 1], [], []>} : vector<64x1000xbf16>, vector<1000x128xbf16>, vector<64x128xf32> -> vector<64x128xf32>
    %c0_3 = arith.constant 0 : index
    %c0_4 = arith.constant 0 : index
    %4 = vector.load %arg3[%c0_3, %c0_4] : memref<1x128xf32, #tpu.memory_space<vmem>>, vector<1x128xf32>
    %5 = vector.broadcast %4 : vector<1x128xf32> to vector<64x128xf32>
    %6 = arith.addf %3, %5 : vector<64x128xf32>
    %c0_5 = arith.constant 0 : index
    %c0_6 = arith.constant 0 : index
    %7 = vector.load %arg4[%c0_5, %c0_6] : memref<64x128xf32, #tpu.memory_space<vmem>>, vector<64x128xf32>
    tpu.vector_store %arg4[%c0_5, %c0_6], %6 {strides = array<i32>} : memref<64x128xf32, #tpu.memory_space<vmem>>, vector<64x128xf32>,
    return
  }
  func.func @transform_0(%arg0: i32) -> (i32, i32) {
    %c0_i32 = arith.constant 0 : i32
    %c0_i32_0 = arith.constant 0 : i32
    return %arg0, %c0_i32 : i32, i32
  }
  func.func @transform_1(%arg0: i32) -> (i32, i32) {
    %c0_i32 = arith.constant 0 : i32
    %c0_i32_0 = arith.constant 0 : i32
    %c0_i32_1 = arith.constant 0 : i32
    return %c0_i32, %c0_i32_0 : i32, i32
  }
  func.func @transform_2(%arg0: i32) -> (i32, i32) {
    %c0_i32 = arith.constant 0 : i32
    %c0_i32_0 = arith.constant 0 : i32
    %c0_i32_1 = arith.constant 0 : i32
    return %c0_i32, %c0_i32_0 : i32, i32
  }
  func.func @transform_3(%arg0: i32) -> (i32, i32) {
    %c0_i32 = arith.constant 0 : i32
    %c0_i32_0 = arith.constant 0 : i32
    return %arg0, %c0_i32 : i32, i32
  }
}

</mosaic_0001>

<llo_original>
// kernel: _pallas_forward.1
$region0: #{_pallas_forward.1}
  #allocation0 [shape = 'u32[]', space=smem, size = 0x4, offset = 0x4, fixed_abs, tag = 'smem constant byte address 0x4 - core index']
  #allocation1 [shape = 'u32[144,128]{1,0:T(1,128)}', space=vmem, size = 0x12000, scoped, tag = 'internal scratch']
  %s0 = inlined_call_operand.vmem [shape: f32[128,1000], index: 0, kind: input, shape index: {}]
  %s1 = inlined_call_operand.vmem [shape: bf16[1000,128], index: 1, kind: input, shape index: {}]
  %s2 = inlined_call_operand.vmem [shape: f32[1,128], index: 2, kind: input, shape index: {}]
  %s3 = inlined_call_operand.vmem [shape: f32[128,128], index: 3, kind: output, shape index: {}]
  %s4 = sld [smem:[#allocation0]]
  $region45: #{_pallas_forward.1} parent=0
    _
  %s6 = ssub.s32 1, %s4
  %s7 = scalar_select 0, %s6, %s4
  loop: start=0, step=1, limit=4
  $region2: #{_pallas_forward.1} parent=0 // loop_pre_header
    _
  $region3: #{_pallas_forward.1} parent=0 // loop_header
    %s9 = sphi 0, %s13
    %p10 = scmp.ge.s32.totalorder %s9, 4
    %s19 = sphi 0, %s21
    %s22 = sphi 0, %s19
    %s23 = sphi 0, %s22
    %s39 = sphi 0, %s23
    %s43 = sphi 0, %s43
    %s45 = sphi 0, %s43
    %s46 = sphi 0, %s45
    %s60 = sphi 0, %s46
    %s64 = sphi 0, %s64
    %s66 = sphi 0, %s64
    %s67 = sphi 0, %s66
    %s81 = sphi 0, %s67
    %s87 = sphi 0, %s89
    %s90 = sphi 0, %s87
    %s91 = sphi 0, %s90
    %s107 = sphi 0, %s91
  $region4: #{_pallas_forward.1} parent=0 // loop_header_branch
    %12 = sbr.rel (%p10) target = $region8
  $region5: #{_pallas_forward.1} parent=0 // loop_body
    %s14 = ssub.s32 %s9, 1
    %s15 = ssub.s32 %s9, 2
    %s16 = sadd.s32 %s9, 1
    %s17 = ssub.s32 %s9, %s16
    %p18 = scmp.eq.s32.totalorder %s17, 0
    %s20 = sadd.s32 %s19, 1
    %s21 = scalar_select %p18, %s19, %s20
    %p24 = pneg %p18
    %p25 = scmp.eq.s32.totalorder %s9, 1
    %p26 = por %p24, %p25
    %p27 = scmp.ne.s32.totalorder %s19, %s22
    %p28 = scmp.eq.s32.totalorder %s9, 0
    %p29 = por %p27, %p28
    %p30 = scmp.ne.s32.totalorder %s19, %s22
    %p31 = scmp.eq.s32.totalorder %s14, 1
    %p32 = por %p30, %p31
    %p33 = scmp.ne.s32.totalorder %s22, %s23
    %p34 = scmp.eq.s32.totalorder %s14, 0
    %p35 = por %p33, %p34
    %p36 = scmp.ne.s32.totalorder %s22, %s23
    %p37 = scmp.eq.s32.totalorder %s15, 1
    %p38 = por %p36, %p37
    %p40 = scmp.ne.s32.totalorder %s23, %s39
    %p41 = scmp.eq.s32.totalorder %s15, 0
    %p42 = por %p40, %p41
    %s44 = sadd.s32 %s43, 1
    %p47 = scmp.eq.s32.totalorder %s9, 1
    %p48 = scmp.ne.s32.totalorder %s43, %s45
    %p49 = scmp.eq.s32.totalorder %s9, 0
    %p50 = por %p48, %p49
    %p51 = scmp.ne.s32.totalorder %s43, %s45
    %p52 = scmp.eq.s32.totalorder %s14, 1
    %p53 = por %p51, %p52
    %p54 = scmp.ne.s32.totalorder %s45, %s46
    %p55 = scmp.eq.s32.totalorder %s14, 0
    %p56 = por %p54, %p55
    %p57 = scmp.ne.s32.totalorder %s45, %s46
    %p58 = scmp.eq.s32.totalorder %s15, 1
    %p59 = por %p57, %p58
    %p61 = scmp.ne.s32.totalorder %s46, %s60
    %p62 = scmp.eq.s32.totalorder %s15, 0
    %p63 = por %p61, %p62
    %s65 = sadd.s32 %s64, 1
    %p68 = scmp.eq.s32.totalorder %s9, 1
    %p69 = scmp.ne.s32.totalorder %s64, %s66
    %p70 = scmp.eq.s32.totalorder %s9, 0
    %p71 = por %p69, %p70
    %p72 = scmp.ne.s32.totalorder %s64, %s66
    %p73 = scmp.eq.s32.totalorder %s14, 1
    %p74 = por %p72, %p73
    %p75 = scmp.ne.s32.totalorder %s66, %s67
    %p76 = scmp.eq.s32.totalorder %s14, 0
    %p77 = por %p75, %p76
    %p78 = scmp.ne.s32.totalorder %s66, %s67
    %p79 = scmp.eq.s32.totalorder %s15, 1
    %p80 = por %p78, %p79
    %p82 = scmp.ne.s32.totalorder %s67, %s81
    %p83 = scmp.eq.s32.totalorder %s15, 0
    %p84 = por %p82, %p83
    %s85 = ssub.s32 %s9, %s16
    %p86 = scmp.eq.s32.totalorder %s85, 0
    %s88 = sadd.s32 %s87, 1
    %s89 = scalar_select %p86, %s87, %s88
    %p92 = pneg %p86
    %p93 = scmp.eq.s32.totalorder %s9, 1
    %p94 = por %p92, %p93
    %p95 = scmp.ne.s32.totalorder %s87, %s90
    %p96 = scmp.eq.s32.totalorder %s9, 0
    %p97 = por %p95, %p96
    %p98 = scmp.ne.s32.totalorder %s87, %s90
    %p99 = scmp.eq.s32.totalorder %s14, 1
    %p100 = por %p98, %p99
    %p101 = scmp.ne.s32.totalorder %s90, %s91
    %p102 = scmp.eq.s32.totalorder %s14, 0
    %p103 = por %p101, %p102
    %p104 = scmp.ne.s32.totalorder %s90, %s91
    %p105 = scmp.eq.s32.totalorder %s15, 1
    %p106 = por %p104, %p105
    %p108 = scmp.ne.s32.totalorder %s91, %s107
    %p109 = scmp.eq.s32.totalorder %s15, 0
    %p110 = por %p108, %p109
    %p111 = scmp.le.s32.totalorder 1, %s9
    %p112 = scmp.lt.s32.totalorder %s9, 3
    %p113 = pnand %p111, %p112
    %p114 = pneg %p113
    // Predicated region
    $region9: #{_pallas_forward.1} parent=5 // pred_check
      _
    $region10: #{_pallas_forward.1} parent=5 // pred_check_branch
      %116 = sbr.rel (%p113) target = $region12
    $region11: #{_pallas_forward.1} parent=5 // pred_region
      %s117 = ssub.s32 %s9, 1
      // Predicated region
      $region13: #{_pallas_forward.1} parent=11 // pred_check
        %p118 = pneg %p56
      $region14: #{_pallas_forward.1} parent=11 // pred_check_branch
        %120 = sbr.rel (%p118) target = $region16
      $region15: #{_pallas_forward.1} parent=11 // pred_region
        _
      $region16: #{_pallas_forward.1} parent=11 // pred_fallthru
        _
      // Predicated region
      $region17: #{_pallas_forward.1} parent=11 // pred_check
        %p121 = pneg %p77
      $region18: #{_pallas_forward.1} parent=11 // pred_check_branch
        %123 = sbr.rel (%p121) target = $region20
      $region19: #{_pallas_forward.1} parent=11 // pred_region
        _
      $region20: #{_pallas_forward.1} parent=11 // pred_fallthru
        _
    $region12: #{_pallas_forward.1} parent=5 // pred_fallthru
      _
    %p124 = scmp.lt.s32.totalorder %s9, 2
    // Predicated region
    $region21: #{_pallas_forward.1} parent=5 // pred_check
      %p125 = pneg %p124
    $region22: #{_pallas_forward.1} parent=5 // pred_check_branch
      %127 = sbr.rel (%p125) target = $region24
    $region23: #{_pallas_forward.1} parent=5 // pred_region
      // Predicated region
      $region25: #{_pallas_forward.1} parent=23 // pred_check
        %p128 = pneg %p29
      $region26: #{_pallas_forward.1} parent=23 // pred_check_branch
        %130 = sbr.rel (%p128) target = $region28
      $region27: #{_pallas_forward.1} parent=23 // pred_region
        %s131 = smul.u32 8, %s9
        %p132 = scmp.lt.s32.totalorder %s131, 15
        %s133 = scalar_select %p132, %s131, 15
        %s134 = smul.addr %s133, 8
        %s135 = smul.addr %s134, 8
        %s136 = scalar_lea.vmem %s0, %s135
        %s137 = smul.u32 8, %s9
      $region28: #{_pallas_forward.1} parent=23 // pred_fallthru
        _
    $region24: #{_pallas_forward.1} parent=5 // pred_fallthru
      _
    %p138 = scmp.le.s32.totalorder 1, %s9
    %p139 = scmp.lt.s32.totalorder %s9, 3
    %p140 = pnand %p138, %p139
    %p141 = pneg %p140
    // Predicated region
    $region29: #{_pallas_forward.1} parent=5 // pred_check
      _
    $region30: #{_pallas_forward.1} parent=5 // pred_check_branch
      %143 = sbr.rel (%p140) target = $region32
    $region31: #{_pallas_forward.1} parent=5 // pred_region
      %s144 = ssub.s32 %s9, 1
      %s145 = smul.u32 8, %s14
      %p146 = scmp.lt.s32.totalorder %s145, 15
      %s147 = scalar_select %p146, %s145, 15
      %s148 = smul.addr %s147, 8
      %s149 = smul.addr %s148, 8
      %s150 = scalar_lea.vmem %s0, %s149
      %p151 = pneg %p35
      %p152 = pneg %p32
      %p153 = pneg %p56
      %p154 = pneg %p53
      %p155 = pneg %p77
      %p156 = pneg %p74
      %p157 = pneg %p103
      %p158 = pneg %p100
      %s159 = smul.u32 8, %s14
      %p160 = scmp.lt.s32.totalorder %s159, 15
      %s161 = scalar_select %p160, %s159, 15
      %s162 = smul.addr %s161, 8
      %s163 = scalar_lea.vmem %s3, %s162
      %s164 = smul.u32 8, %s14
      %p165 = scmp.lt.s32.totalorder %s164, 15
      %s166 = scalar_select %p165, %s164, 15
      %s167 = smul.addr %s166, 8
      %s168 = smul.addr %s167, 8
      %s169 = scalar_lea.vmem %s0, %s168
      %s170 = smul.u32 8, %s14
      %s171 = smul.u32 8, %s14
      %p172 = scmp.lt.s32.totalorder %s171, 15
      %s173 = scalar_select %p172, %s171, 15
      %s174 = smul.addr %s173, 8
      %s175 = scalar_lea.vmem %s3, %s174
      %s176 = smul.u32 8, %s14
      %v178 = vld [vmem:[%s169] sm:$0xff]
      %v179 = vld [vmem:[%s169 + $0x8] sm:$0xff]
      %v180 = vld [vmem:[%s169 + $0x10] sm:$0xff]
      %v181 = vld [vmem:[%s169 + $0x18] sm:$0xff]
      %v182 = vld [vmem:[%s169 + $0x20] sm:$0xff]
      %v183 = vld [vmem:[%s169 + $0x28] sm:$0xff]
      %v184 = vld [vmem:[%s169 + $0x30] sm:$0xff]
      %v185 = vld [vmem:[%s169 + $0x38] sm:$0xff]
      %v186 = vld [vmem:[%s169 + $0x40] sm:$0xff]
      %v187 = vld [vmem:[%s169 + $0x48] sm:$0xff]
      %v188 = vld [vmem:[%s169 + $0x50] sm:$0xff]
      %v189 = vld [vmem:[%s169 + $0x58] sm:$0xff]
      %v190 = vld [vmem:[%s169 + $0x60] sm:$0xff]
      %v191 = vld [vmem:[%s169 + $0x68] sm:$0xff]
      %v192 = vld [vmem:[%s169 + $0x70] sm:$0xff]
      %v193 = vld [vmem:[%s169 + $0x78] sm:$0xff]
      %v194 = vld [vmem:[%s169 + $0x80] sm:$0xff]
      %v195 = vld [vmem:[%s169 + $0x88] sm:$0xff]
      %v196 = vld [vmem:[%s169 + $0x90] sm:$0xff]
      %v197 = vld [vmem:[%s169 + $0x98] sm:$0xff]
      %v198 = vld [vmem:[%s169 + $0xa0] sm:$0xff]
      %v199 = vld [vmem:[%s169 + $0xa8] sm:$0xff]
      %v200 = vld [vmem:[%s169 + $0xb0] sm:$0xff]
      %v201 = vld [vmem:[%s169 + $0xb8] sm:$0xff]
      %v202 = vld [vmem:[%s169 + $0xc0] sm:$0xff]
      %v203 = vld [vmem:[%s169 + $0xc8] sm:$0xff]
      %v204 = vld [vmem:[%s169 + $0xd0] sm:$0xff]
      %v205 = vld [vmem:[%s169 + $0xd8] sm:$0xff]
      %v206 = vld [vmem:[%s169 + $0xe0] sm:$0xff]
      %v207 = vld [vmem:[%s169 + $0xe8] sm:$0xff]
      %v208 = vld [vmem:[%s169 + $0xf0] sm:$0xff]
      %v209 = vld [vmem:[%s169 + $0xf8] sm:$0xff]
      %v210 = vld [vmem:[%s169 + $0x100] sm:$0xff]
      %v211 = vld [vmem:[%s169 + $0x108] sm:$0xff]
      %v212 = vld [vmem:[%s169 + $0x110] sm:$0xff]
      %v213 = vld [vmem:[%s169 + $0x118] sm:$0xff]
      %v214 = vld [vmem:[%s169 + $0x120] sm:$0xff]
      %v215 = vld [vmem:[%s169 + $0x128] sm:$0xff]
      %v216 = vld [vmem:[%s169 + $0x130] sm:$0xff]
      %v217 = vld [vmem:[%s169 + $0x138] sm:$0xff]
      %v218 = vld [vmem:[%s169 + $0x140] sm:$0xff]
      %v219 = vld [vmem:[%s169 + $0x148] sm:$0xff]
      %v220 = vld [vmem:[%s169 + $0x150] sm:$0xff]
      %v221 = vld [vmem:[%s169 + $0x158] sm:$0xff]
      %v222 = vld [vmem:[%s169 + $0x160] sm:$0xff]
      %v223 = vld [vmem:[%s169 + $0x168] sm:$0xff]
      %v224 = vld [vmem:[%s169 + $0x170] sm:$0xff]
      %v225 = vld [vmem:[%s169 + $0x178] sm:$0xff]
      %v226 = vld [vmem:[%s169 + $0x180] sm:$0xff]
      %v227 = vld [vmem:[%s169 + $0x188] sm:$0xff]
      %v228 = vld [vmem:[%s169 + $0x190] sm:$0xff]
      %v229 = vld [vmem:[%s169 + $0x198] sm:$0xff]
      %v230 = vld [vmem:[%s169 + $0x1a0] sm:$0xff]
      %v231 = vld [vmem:[%s169 + $0x1a8] sm:$0xff]
      %v232 = vld [vmem:[%s169 + $0x1b0] sm:$0xff]
      %v233 = vld [vmem:[%s169 + $0x1b8] sm:$0xff]
      %v234 = vld [vmem:[%s169 + $0x1c0] sm:$0xff]
      %v235 = vld [vmem:[%s169 + $0x1c8] sm:$0xff]
      %v236 = vld [vmem:[%s169 + $0x1d0] sm:$0xff]
      %v237 = vld [vmem:[%s169 + $0x1d8] sm:$0xff]
      %v238 = vld [vmem:[%s169 + $0x1e0] sm:$0xff]
      %v239 = vld [vmem:[%s169 + $0x1e8] sm:$0xff]
      %v240 = vld [vmem:[%s169 + $0x1f0] sm:$0xff]
      %v241 = vld [vmem:[%s169 + $0x1f8] sm:$0xff]
      %v242 = vpack.c.bf16 %v186, %v178
      %v243 = vpack.c.bf16 %v187, %v179
      %v244 = vpack.c.bf16 %v188, %v180
      %v245 = vpack.c.bf16 %v189, %v181
      %v246 = vpack.c.bf16 %v190, %v182
      %v247 = vpack.c.bf16 %v191, %v183
      %v248 = vpack.c.bf16 %v192, %v184
      %v249 = vpack.c.bf16 %v193, %v185
      %v250 = vpack.c.bf16 %v202, %v194
      %v251 = vpack.c.bf16 %v203, %v195
      %v252 = vpack.c.bf16 %v204, %v196
      %v253 = vpack.c.bf16 %v205, %v197
      %v254 = vpack.c.bf16 %v206, %v198
      %v255 = vpack.c.bf16 %v207, %v199
      %v256 = vpack.c.bf16 %v208, %v200
      %v257 = vpack.c.bf16 %v209, %v201
      %v258 = vpack.c.bf16 %v218, %v210
      %v259 = vpack.c.bf16 %v219, %v211
      %v260 = vpack.c.bf16 %v220, %v212
      %v261 = vpack.c.bf16 %v221, %v213
      %v262 = vpack.c.bf16 %v222, %v214
      %v263 = vpack.c.bf16 %v223, %v215
      %v264 = vpack.c.bf16 %v224, %v216
      %v265 = vpack.c.bf16 %v225, %v217
      %v266 = vpack.c.bf16 %v234, %v226
      %v267 = vpack.c.bf16 %v235, %v227
      %v268 = vpack.c.bf16 %v236, %v228
      %v269 = vpack.c.bf16 %v237, %v229
      %v270 = vpack.c.bf16 %v238, %v230
      %v271 = vpack.c.bf16 %v239, %v231
      %v272 = vpack.c.bf16 %v240, %v232
      %v273 = vpack.c.bf16 %v241, %v233
      %v274 = vld [vmem:[%s1] sm:$0xf]
      %v275 = vld [vmem:[%s1 + $0x4] sm:$0xf]
      %v276 = vld [vmem:[%s1 + $0x8] sm:$0xf]
      %v277 = vld [vmem:[%s1 + $0xc] sm:$0xf]
      %v278 = vld [vmem:[%s1 + $0x10] sm:$0xf]
      %v279 = vld [vmem:[%s1 + $0x14] sm:$0xf]
      %v280 = vld [vmem:[%s1 + $0x18] sm:$0xf]
      %v281 = vld [vmem:[%s1 + $0x1c] sm:$0xf]
      %v282 = vld [vmem:[%s1 + $0x20] sm:$0xf]
      %v283 = vld [vmem:[%s1 + $0x24] sm:$0xf]
      %v284 = vld [vmem:[%s1 + $0x28] sm:$0xf]
      %v285 = vld [vmem:[%s1 + $0x2c] sm:$0xf]
      %v286 = vld [vmem:[%s1 + $0x30] sm:$0xf]
      %v287 = vld [vmem:[%s1 + $0x34] sm:$0xf]
      %v288 = vld [vmem:[%s1 + $0x38] sm:$0xf]
      %v289 = vld [vmem:[%s1 + $0x3c] sm:$0xf]
      %v290 = vld [vmem:[%s1 + $0x40] sm:$0xf]
      %v291 = vld [vmem:[%s1 + $0x44] sm:$0xf]
      %v292 = vld [vmem:[%s1 + $0x48] sm:$0xf]
      %v293 = vld [vmem:[%s1 + $0x4c] sm:$0xf]
      %v294 = vld [vmem:[%s1 + $0x50] sm:$0xf]
      %v295 = vld [vmem:[%s1 + $0x54] sm:$0xf]
      %v296 = vld [vmem:[%s1 + $0x58] sm:$0xf]
      %v297 = vld [vmem:[%s1 + $0x5c] sm:$0xf]
      %v298 = vld [vmem:[%s1 + $0x60] sm:$0xf]
      %v299 = vld [vmem:[%s1 + $0x64] sm:$0xf]
      %v300 = vld [vmem:[%s1 + $0x68] sm:$0xf]
      %v301 = vld [vmem:[%s1 + $0x6c] sm:$0xf]
      %v302 = vld [vmem:[%s1 + $0x70] sm:$0xf]
      %v303 = vld [vmem:[%s1 + $0x74] sm:$0xf]
      %v304 = vld [vmem:[%s1 + $0x78] sm:$0xf]
      %v305 = vld [vmem:[%s1 + $0x7c] sm:$0xf]
      %v306 = vld [vmem:[%s1 + $0x80] sm:$0xf]
      %v307 = vld [vmem:[%s1 + $0x84] sm:$0xf]
      %v308 = vld [vmem:[%s1 + $0x88] sm:$0xf]
      %v309 = vld [vmem:[%s1 + $0x8c] sm:$0xf]
      %v310 = vld [vmem:[%s1 + $0x90] sm:$0xf]
      %v311 = vld [vmem:[%s1 + $0x94] sm:$0xf]
      %v312 = vld [vmem:[%s1 + $0x98] sm:$0xf]
      %v313 = vld [vmem:[%s1 + $0x9c] sm:$0xf]
      %v314 = vld [vmem:[%s1 + $0xa0] sm:$0xf]
      %v315 = vld [vmem:[%s1 + $0xa4] sm:$0xf]
      %v316 = vld [vmem:[%s1 + $0xa8] sm:$0xf]
      %v317 = vld [vmem:[%s1 + $0xac] sm:$0xf]
      %v318 = vld [vmem:[%s1 + $0xb0] sm:$0xf]
      %v319 = vld [vmem:[%s1 + $0xb4] sm:$0xf]
      %v320 = vld [vmem:[%s1 + $0xb8] sm:$0xf]
      %v321 = vld [vmem:[%s1 + $0xbc] sm:$0xf]
      %v322 = vld [vmem:[%s1 + $0xc0] sm:$0xf]
      %v323 = vld [vmem:[%s1 + $0xc4] sm:$0xf]
      %v324 = vld [vmem:[%s1 + $0xc8] sm:$0xf]
      %v325 = vld [vmem:[%s1 + $0xcc] sm:$0xf]
      %v326 = vld [vmem:[%s1 + $0xd0] sm:$0xf]
      %v327 = vld [vmem:[%s1 + $0xd4] sm:$0xf]
      %v328 = vld [vmem:[%s1 + $0xd8] sm:$0xf]
      %v329 = vld [vmem:[%s1 + $0xdc] sm:$0xf]
      %v330 = vld [vmem:[%s1 + $0xe0] sm:$0xf]
      %v331 = vld [vmem:[%s1 + $0xe4] sm:$0xf]
      %v332 = vld [vmem:[%s1 + $0xe8] sm:$0xf]
      %v333 = vld [vmem:[%s1 + $0xec] sm:$0xf]
      %v334 = vld [vmem:[%s1 + $0xf0] sm:$0xf]
      %v335 = vld [vmem:[%s1 + $0xf4] sm:$0xf]
      %v336 = vld [vmem:[%s1 + $0xf8] sm:$0xf]
      %v337 = vld [vmem:[%s1 + $0xfc] sm:$0xf]
      %v338 = vld [vmem:[%s1 + $0x100] sm:$0xf]
      %v339 = vld [vmem:[%s1 + $0x104] sm:$0xf]
      %v340 = vld [vmem:[%s1 + $0x108] sm:$0xf]
      %v341 = vld [vmem:[%s1 + $0x10c] sm:$0xf]
      %v342 = vld [vmem:[%s1 + $0x110] sm:$0xf]
      %v343 = vld [vmem:[%s1 + $0x114] sm:$0xf]
      %v344 = vld [vmem:[%s1 + $0x118] sm:$0xf]
      %v345 = vld [vmem:[%s1 + $0x11c] sm:$0xf]
      %v346 = vld [vmem:[%s1 + $0x120] sm:$0xf]
      %v347 = vld [vmem:[%s1 + $0x124] sm:$0xf]
      %v348 = vld [vmem:[%s1 + $0x128] sm:$0xf]
      %v349 = vld [vmem:[%s1 + $0x12c] sm:$0xf]
      %v350 = vld [vmem:[%s1 + $0x130] sm:$0xf]
      %v351 = vld [vmem:[%s1 + $0x134] sm:$0xf]
      %v352 = vld [vmem:[%s1 + $0x138] sm:$0xf]
      %v353 = vld [vmem:[%s1 + $0x13c] sm:$0xf]
      %v354 = vld [vmem:[%s1 + $0x140] sm:$0xf]
      %v355 = vld [vmem:[%s1 + $0x144] sm:$0xf]
      %v356 = vld [vmem:[%s1 + $0x148] sm:$0xf]
      %v357 = vld [vmem:[%s1 + $0x14c] sm:$0xf]
      %v358 = vld [vmem:[%s1 + $0x150] sm:$0xf]
      %v359 = vld [vmem:[%s1 + $0x154] sm:$0xf]
      %v360 = vld [vmem:[%s1 + $0x158] sm:$0xf]
      %v361 = vld [vmem:[%s1 + $0x15c] sm:$0xf]
      %v362 = vld [vmem:[%s1 + $0x160] sm:$0xf]
      %v363 = vld [vmem:[%s1 + $0x164] sm:$0xf]
      %v364 = vld [vmem:[%s1 + $0x168] sm:$0xf]
      %v365 = vld [vmem:[%s1 + $0x16c] sm:$0xf]
      %v366 = vld [vmem:[%s1 + $0x170] sm:$0xf]
      %v367 = vld [vmem:[%s1 + $0x174] sm:$0xf]
      %v368 = vld [vmem:[%s1 + $0x178] sm:$0xf]
      %v369 = vld [vmem:[%s1 + $0x17c] sm:$0xf]
      %v370 = vld [vmem:[%s1 + $0x180] sm:$0xf]
      %v371 = vld [vmem:[%s1 + $0x184] sm:$0xf]
      %v372 = vld [vmem:[%s1 + $0x188] sm:$0xf]
      %v373 = vld [vmem:[%s1 + $0x18c] sm:$0xf]
      %v374 = vld [vmem:[%s1 + $0x190] sm:$0xf]
      %v375 = vld [vmem:[%s1 + $0x194] sm:$0xf]
      %v376 = vld [vmem:[%s1 + $0x198] sm:$0xf]
      %v377 = vld [vmem:[%s1 + $0x19c] sm:$0xf]
      %v378 = vld [vmem:[%s1 + $0x1a0] sm:$0xf]
      %v379 = vld [vmem:[%s1 + $0x1a4] sm:$0xf]
      %v380 = vld [vmem:[%s1 + $0x1a8] sm:$0xf]
      %v381 = vld [vmem:[%s1 + $0x1ac] sm:$0xf]
      %v382 = vld [vmem:[%s1 + $0x1b0] sm:$0xf]
      %v383 = vld [vmem:[%s1 + $0x1b4] sm:$0xf]
      %v384 = vld [vmem:[%s1 + $0x1b8] sm:$0xf]
      %v385 = vld [vmem:[%s1 + $0x1bc] sm:$0xf]
      %v386 = vld [vmem:[%s1 + $0x1c0] sm:$0xf]
      %v387 = vld [vmem:[%s1 + $0x1c4] sm:$0xf]
      %v388 = vld [vmem:[%s1 + $0x1c8] sm:$0xf]
      %v389 = vld [vmem:[%s1 + $0x1cc] sm:$0xf]
      %v390 = vld [vmem:[%s1 + $0x1d0] sm:$0xf]
      %v391 = vld [vmem:[%s1 + $0x1d4] sm:$0xf]
      %v392 = vld [vmem:[%s1 + $0x1d8] sm:$0xf]
      %v393 = vld [vmem:[%s1 + $0x1dc] sm:$0xf]
      %v394 = vld [vmem:[%s1 + $0x1e0] sm:$0xf]
      %v395 = vld [vmem:[%s1 + $0x1e4] sm:$0xf]
      %v396 = vld [vmem:[%s1 + $0x1e8] sm:$0xf]
      %v397 = vld [vmem:[%s1 + $0x1ec] sm:$0xf]
      %v398 = vld [vmem:[%s1 + $0x1f0] sm:$0xf]
      %v399 = vld [vmem:[%s2] sm:$0x1]
      %v401 = vlaneseq
      %v402 = vshrl.u32 %v401, 7
      %v403 = vsub.s32 0, %v402
      %v404 = vrot.slane %v399, %v403
      %v531 = vunpack.c.l.b16 %v274
      %v532 = vunpack.c.l.b16 %v275
      %v533 = vunpack.c.l.b16 %v276
      %v534 = vunpack.c.l.b16 %v277
      %v535 = vunpack.c.l.b16 %v278
      %v536 = vunpack.c.l.b16 %v279
      %v537 = vunpack.c.l.b16 %v280
      %v538 = vunpack.c.l.b16 %v281
      %v539 = vunpack.c.l.b16 %v282
      %v540 = vunpack.c.l.b16 %v283
      %v541 = vunpack.c.l.b16 %v284
      %v542 = vunpack.c.l.b16 %v285
      %v543 = vunpack.c.l.b16 %v286
      %v544 = vunpack.c.l.b16 %v287
      %v545 = vunpack.c.l.b16 %v288
      %v546 = vunpack.c.l.b16 %v289
      %v547 = vunpack.c.l.b16 %v290
      %v548 = vunpack.c.l.b16 %v291
      %v549 = vunpack.c.l.b16 %v292
      %v550 = vunpack.c.l.b16 %v293
      %v551 = vunpack.c.l.b16 %v294
      %v552 = vunpack.c.l.b16 %v295
      %v553 = vunpack.c.l.b16 %v296
      %v554 = vunpack.c.l.b16 %v297
      %v555 = vunpack.c.l.b16 %v298
      %v556 = vunpack.c.l.b16 %v299
      %v557 = vunpack.c.l.b16 %v300
      %v558 = vunpack.c.l.b16 %v301
      %v559 = vunpack.c.l.b16 %v302
      %v560 = vunpack.c.l.b16 %v303
      %v561 = vunpack.c.l.b16 %v304
      %v562 = vunpack.c.l.b16 %v305
      %v563 = vunpack.c.l.b16 %v306
      %v564 = vunpack.c.l.b16 %v307
      %v565 = vunpack.c.l.b16 %v308
      %v566 = vunpack.c.l.b16 %v309
      %v567 = vunpack.c.l.b16 %v310
      %v568 = vunpack.c.l.b16 %v311
      %v569 = vunpack.c.l.b16 %v312
      %v570 = vunpack.c.l.b16 %v313
      %v571 = vunpack.c.l.b16 %v314
      %v572 = vunpack.c.l.b16 %v315
      %v573 = vunpack.c.l.b16 %v316
      %v574 = vunpack.c.l.b16 %v317
      %v575 = vunpack.c.l.b16 %v318
      %v576 = vunpack.c.l.b16 %v319
      %v577 = vunpack.c.l.b16 %v320
      %v578 = vunpack.c.l.b16 %v321
      %v579 = vunpack.c.l.b16 %v322
      %v580 = vunpack.c.l.b16 %v323
      %v581 = vunpack.c.l.b16 %v324
      %v582 = vunpack.c.l.b16 %v325
      %v583 = vunpack.c.l.b16 %v326
      %v584 = vunpack.c.l.b16 %v327
      %v585 = vunpack.c.l.b16 %v328
      %v586 = vunpack.c.l.b16 %v329
      %v587 = vunpack.c.l.b16 %v330
      %v588 = vunpack.c.l.b16 %v331
      %v589 = vunpack.c.l.b16 %v332
      %v590 = vunpack.c.l.b16 %v333
      %v591 = vunpack.c.l.b16 %v334
      %v592 = vunpack.c.l.b16 %v335
      %v593 = vunpack.c.l.b16 %v336
      %v594 = vunpack.c.l.b16 %v337
      %v595 = vunpack.c.l.b16 %v338
      %v596 = vunpack.c.l.b16 %v339
      %v597 = vunpack.c.l.b16 %v340
      %v598 = vunpack.c.l.b16 %v341
      %v599 = vunpack.c.l.b16 %v342
      %v600 = vunpack.c.l.b16 %v343
      %v601 = vunpack.c.l.b16 %v344
      %v602 = vunpack.c.l.b16 %v345
      %v603 = vunpack.c.l.b16 %v346
      %v604 = vunpack.c.l.b16 %v347
      %v605 = vunpack.c.l.b16 %v348
      %v606 = vunpack.c.l.b16 %v349
      %v607 = vunpack.c.l.b16 %v350
      %v608 = vunpack.c.l.b16 %v351
      %v609 = vunpack.c.l.b16 %v352
      %v610 = vunpack.c.l.b16 %v353
      %v611 = vunpack.c.l.b16 %v354
      %v612 = vunpack.c.l.b16 %v355
      %v613 = vunpack.c.l.b16 %v356
      %v614 = vunpack.c.l.b16 %v357
      %v615 = vunpack.c.l.b16 %v358
      %v616 = vunpack.c.l.b16 %v359
      %v617 = vunpack.c.l.b16 %v360
      %v618 = vunpack.c.l.b16 %v361
      %v619 = vunpack.c.l.b16 %v362
      %v620 = vunpack.c.l.b16 %v363
      %v621 = vunpack.c.l.b16 %v364
      %v622 = vunpack.c.l.b16 %v365
      %v623 = vunpack.c.l.b16 %v366
      %v624 = vunpack.c.l.b16 %v367
      %v625 = vunpack.c.l.b16 %v368
      %v626 = vunpack.c.l.b16 %v369
      %v627 = vunpack.c.l.b16 %v370
      %v628 = vunpack.c.l.b16 %v371
      %v629 = vunpack.c.l.b16 %v372
      %v630 = vunpack.c.l.b16 %v373
      %v631 = vunpack.c.l.b16 %v374
      %v632 = vunpack.c.l.b16 %v375
      %v633 = vunpack.c.l.b16 %v376
      %v634 = vunpack.c.l.b16 %v377
      %v635 = vunpack.c.l.b16 %v378
      %v636 = vunpack.c.l.b16 %v379
      %v637 = vunpack.c.l.b16 %v380
      %v638 = vunpack.c.l.b16 %v381
      %v639 = vunpack.c.l.b16 %v382
      %v640 = vunpack.c.l.b16 %v383
      %v641 = vunpack.c.l.b16 %v384
      %v642 = vunpack.c.l.b16 %v385
      %v643 = vunpack.c.l.b16 %v386
      %v644 = vunpack.c.l.b16 %v387
      %v645 = vunpack.c.l.b16 %v388
      %v646 = vunpack.c.l.b16 %v389
      %v647 = vunpack.c.l.b16 %v390
      %v648 = vunpack.c.l.b16 %v391
      %v649 = vunpack.c.l.b16 %v392
      %v650 = vunpack.c.l.b16 %v393
      %v651 = vunpack.c.l.b16 %v394
      %v652 = vunpack.c.l.b16 %v395
      %v653 = vunpack.c.l.b16 %v396
      %v654 = vunpack.c.l.b16 %v397
      %v655 = vunpack.c.l.b16 %v398
      %v656 = vpack.c.b16 %v532, %v531
      %v657 = vpack.c.b16 %v534, %v533
      %v658 = vpack.c.b16 %v536, %v535
      %v659 = vpack.c.b16 %v538, %v537
      %v660 = vpack.c.b16 %v540, %v539
      %v661 = vpack.c.b16 %v542, %v541
      %v662 = vpack.c.b16 %v544, %v543
      %v663 = vpack.c.b16 %v546, %v545
      %v664 = vpack.c.b16 %v548, %v547
      %v665 = vpack.c.b16 %v550, %v549
      %v666 = vpack.c.b16 %v552, %v551
      %v667 = vpack.c.b16 %v554, %v553
      %v668 = vpack.c.b16 %v556, %v555
      %v669 = vpack.c.b16 %v558, %v557
      %v670 = vpack.c.b16 %v560, %v559
      %v671 = vpack.c.b16 %v562, %v561
      %v672 = vpack.c.b16 %v564, %v563
      %v673 = vpack.c.b16 %v566, %v565
      %v674 = vpack.c.b16 %v568, %v567
      %v675 = vpack.c.b16 %v570, %v569
      %v676 = vpack.c.b16 %v572, %v571
      %v677 = vpack.c.b16 %v574, %v573
      %v678 = vpack.c.b16 %v576, %v575
      %v679 = vpack.c.b16 %v578, %v577
      %v680 = vpack.c.b16 %v580, %v579
      %v681 = vpack.c.b16 %v582, %v581
      %v682 = vpack.c.b16 %v584, %v583
      %v683 = vpack.c.b16 %v586, %v585
      %v684 = vpack.c.b16 %v588, %v587
      %v685 = vpack.c.b16 %v590, %v589
      %v686 = vpack.c.b16 %v592, %v591
      %v687 = vpack.c.b16 %v594, %v593
      %v688 = vpack.c.b16 %v596, %v595
      %v689 = vpack.c.b16 %v598, %v597
      %v690 = vpack.c.b16 %v600, %v599
      %v691 = vpack.c.b16 %v602, %v601
      %v692 = vpack.c.b16 %v604, %v603
      %v693 = vpack.c.b16 %v606, %v605
      %v694 = vpack.c.b16 %v608, %v607
      %v695 = vpack.c.b16 %v610, %v609
      %v696 = vpack.c.b16 %v612, %v611
      %v697 = vpack.c.b16 %v614, %v613
      %v698 = vpack.c.b16 %v616, %v615
      %v699 = vpack.c.b16 %v618, %v617
      %v700 = vpack.c.b16 %v620, %v619
      %v701 = vpack.c.b16 %v622, %v621
      %v702 = vpack.c.b16 %v624, %v623
      %v703 = vpack.c.b16 %v626, %v625
      %v704 = vpack.c.b16 %v628, %v627
      %v705 = vpack.c.b16 %v630, %v629
      %v706 = vpack.c.b16 %v632, %v631
      %v707 = vpack.c.b16 %v634, %v633
      %v708 = vpack.c.b16 %v636, %v635
      %v709 = vpack.c.b16 %v638, %v637
      %v710 = vpack.c.b16 %v640, %v639
      %v711 = vpack.c.b16 %v642, %v641
      %v712 = vpack.c.b16 %v644, %v643
      %v713 = vpack.c.b16 %v646, %v645
      %v714 = vpack.c.b16 %v648, %v647
      %v715 = vpack.c.b16 %v650, %v649
      %v716 = vpack.c.b16 %v652, %v651
      %v717 = vpack.c.b16 %v654, %v653
      %v718 = vpack.c.b16 %v655, %v655
      %vm781 = vcmask 850944
      %v783 = vsel %vm781, %v249, 0
      %v786 = vsel %vm781, %v257, 0
      %v789 = vsel %vm781, %v265, 0
      %v792 = vsel %vm781, %v273, 0
      %vm794 = vcmask 1043456
      %v796 = vsel %vm794, %v718, 0
      %798 = vmatprep.subr.bf16.mxu0 0
      %799 = vmatpush1.bf16.msra.mxu0 %v656
      %800 = vmatprep.subr.bf16.mxu0 0
      %801 = vmatpush1.bf16.msra.mxu0 %v657
      %802 = vmatprep.subr.bf16.mxu0 0
      %803 = vmatpush1.bf16.msra.mxu0 %v658
      %804 = vmatprep.subr.bf16.mxu0 0
      %805 = vmatpush1.bf16.msra.mxu0 %v659
      %806 = vmatprep.subr.bf16.mxu0 0
      %807 = vmatpush1.bf16.msra.mxu0 %v660
      %808 = vmatprep.subr.bf16.mxu0 0
      %809 = vmatpush1.bf16.msra.mxu0 %v661
      %810 = vmatprep.subr.bf16.mxu0 0
      %811 = vmatpush1.bf16.msra.mxu0 %v662
      %812 = vmatprep.subr.bf16.mxu0 0
      %813 = vmatpush1.bf16.msra.mxu0 %v663
      %814 = vmatprep.subr.bf16.mxu0 0
      %815 = vmatpush1.bf16.msra.mxu0 %v664
      %816 = vmatprep.subr.bf16.mxu0 0
      %817 = vmatpush1.bf16.msra.mxu0 %v665
      %818 = vmatprep.subr.bf16.mxu0 0
      %819 = vmatpush1.bf16.msra.mxu0 %v666
      %820 = vmatprep.subr.bf16.mxu0 0
      %821 = vmatpush1.bf16.msra.mxu0 %v667
      %822 = vmatprep.subr.bf16.mxu0 0
      %823 = vmatpush1.bf16.msra.mxu0 %v668
      %824 = vmatprep.subr.bf16.mxu0 0
      %825 = vmatpush1.bf16.msra.mxu0 %v669
      %826 = vmatprep.subr.bf16.mxu0 0
      %827 = vmatpush1.bf16.msra.mxu0 %v670
      %828 = vmatprep.subr.bf16.mxu0 0
      %829 = vmatpush1.bf16.msra.mxu0 %v671
      %830 = vmatprep.mubr.bf16.mxu0 %v243
      %831 = vmatmul.mubr.bf16.gmra.mrb[0].mxu0 %v242
      %v832 = vpop.f32.mrb[0].mxu0
      %v833 = vadd.f32 %v404, %v832
      %v834 = vpop.f32.mrb[0].mxu0
      %v835 = vpop.f32.mrb[0].mxu0
      %v836 = vadd.f32 %v404, %v835
      %v837 = vpop.f32.mrb[0].mxu0
      %838 = vmatprep.mubr.bf16.mxu0 %v251
      %839 = vmatmul.mubr.bf16.gmra.mrb[0].mxu0 %v250
      %v840 = vpop.f32.mrb[0].mxu0
      %v841 = vadd.f32 %v404, %v840
      %v842 = vpop.f32.mrb[0].mxu0
      %v843 = vpop.f32.mrb[0].mxu0
      %v844 = vadd.f32 %v404, %v843
      %v845 = vpop.f32.mrb[0].mxu0
      %846 = vmatprep.mubr.bf16.mxu0 %v259
      %847 = vmatmul.mubr.bf16.gmra.mrb[0].mxu0 %v258
      %v848 = vpop.f32.mrb[0].mxu0
      %v849 = vadd.f32 %v404, %v848
      %v850 = vpop.f32.mrb[0].mxu0
      %v851 = vpop.f32.mrb[0].mxu0
      %v852 = vadd.f32 %v404, %v851
      %v853 = vpop.f32.mrb[0].mxu0
      %854 = vmatprep.mubr.bf16.mxu0 %v267
      %855 = vmatmul.mubr.bf16.gmra.mrb[0].mxu0 %v266
      %v856 = vpop.f32.mrb[0].mxu0
      %v857 = vadd.f32 %v404, %v856
      %v858 = vpop.f32.mrb[0].mxu0
      %v859 = vpop.f32.mrb[0].mxu0
      %v860 = vadd.f32 %v404, %v859
      %v861 = vpop.f32.mrb[0].mxu0
      %862 = vdwg.mxu0
      %863 = vmatprep.subr.bf16.mxu0 0
      %864 = vmatpush1.bf16.msra.mxu0 %v672
      %865 = vmatprep.subr.bf16.mxu0 0
      %866 = vmatpush1.bf16.msra.mxu0 %v673
      %867 = vmatprep.subr.bf16.mxu0 0
      %868 = vmatpush1.bf16.msra.mxu0 %v674
      %869 = vmatprep.subr.bf16.mxu0 0
      %870 = vmatpush1.bf16.msra.mxu0 %v675
      %871 = vmatprep.subr.bf16.mxu0 0
      %872 = vmatpush1.bf16.msra.mxu0 %v676
      %873 = vmatprep.subr.bf16.mxu0 0
      %874 = vmatpush1.bf16.msra.mxu0 %v677
      %875 = vmatprep.subr.bf16.mxu0 0
      %876 = vmatpush1.bf16.msra.mxu0 %v678
      %877 = vmatprep.subr.bf16.mxu0 0
      %878 = vmatpush1.bf16.msra.mxu0 %v679
      %879 = vmatprep.subr.bf16.mxu0 0
      %880 = vmatpush1.bf16.msra.mxu0 %v680
      %881 = vmatprep.subr.bf16.mxu0 0
      %882 = vmatpush1.bf16.msra.mxu0 %v681
      %883 = vmatprep.subr.bf16.mxu0 0
      %884 = vmatpush1.bf16.msra.mxu0 %v682
      %885 = vmatprep.subr.bf16.mxu0 0
      %886 = vmatpush1.bf16.msra.mxu0 %v683
      %887 = vmatprep.subr.bf16.mxu0 0
      %888 = vmatpush1.bf16.msra.mxu0 %v684
      %889 = vmatprep.subr.bf16.mxu0 0
      %890 = vmatpush1.bf16.msra.mxu0 %v685
      %891 = vmatprep.subr.bf16.mxu0 0
      %892 = vmatpush1.bf16.msra.mxu0 %v686
      %893 = vmatprep.subr.bf16.mxu0 0
      %894 = vmatpush1.bf16.msra.mxu0 %v687
      %895 = vmatprep.mubr.bf16.mxu0 %v245
      %896 = vmatmul.mubr.bf16.gmra.mrb[0].mxu0 %v244
      %v897 = vpop.f32.mrb[0].mxu0
      %v898 = vadd.f32 %v833, %v897
      %v899 = vpop.f32.mrb[0].mxu0
      %v900 = vpop.f32.mrb[0].mxu0
      %v901 = vadd.f32 %v836, %v900
      %v902 = vpop.f32.mrb[0].mxu0
      %903 = vmatprep.mubr.bf16.mxu0 %v253
      %904 = vmatmul.mubr.bf16.gmra.mrb[0].mxu0 %v252
      %v905 = vpop.f32.mrb[0].mxu0
      %v906 = vadd.f32 %v841, %v905
      %v907 = vpop.f32.mrb[0].mxu0
      %v908 = vpop.f32.mrb[0].mxu0
      %v909 = vadd.f32 %v844, %v908
      %v910 = vpop.f32.mrb[0].mxu0
      %911 = vmatprep.mubr.bf16.mxu0 %v261
      %912 = vmatmul.mubr.bf16.gmra.mrb[0].mxu0 %v260
      %v913 = vpop.f32.mrb[0].mxu0
      %v914 = vadd.f32 %v849, %v913
      %v915 = vpop.f32.mrb[0].mxu0
      %v916 = vpop.f32.mrb[0].mxu0
      %v917 = vadd.f32 %v852, %v916
      %v918 = vpop.f32.mrb[0].mxu0
      %919 = vmatprep.mubr.bf16.mxu0 %v269
      %920 = vmatmul.mubr.bf16.gmra.mrb[0].mxu0 %v268
      %v921 = vpop.f32.mrb[0].mxu0
      %v922 = vadd.f32 %v857, %v921
      %v923 = vpop.f32.mrb[0].mxu0
      %v924 = vpop.f32.mrb[0].mxu0
      %v925 = vadd.f32 %v860, %v924
      %v926 = vpop.f32.mrb[0].mxu0
      %927 = vdwg.mxu0
      %928 = vmatprep.subr.bf16.mxu0 0
      %929 = vmatpush1.bf16.msra.mxu0 %v688
      %930 = vmatprep.subr.bf16.mxu0 0
      %931 = vmatpush1.bf16.msra.mxu0 %v689
      %932 = vmatprep.subr.bf16.mxu0 0
      %933 = vmatpush1.bf16.msra.mxu0 %v690
      %934 = vmatprep.subr.bf16.mxu0 0
      %935 = vmatpush1.bf16.msra.mxu0 %v691
      %936 = vmatprep.subr.bf16.mxu0 0
      %937 = vmatpush1.bf16.msra.mxu0 %v692
      %938 = vmatprep.subr.bf16.mxu0 0
      %939 = vmatpush1.bf16.msra.mxu0 %v693
      %940 = vmatprep.subr.bf16.mxu0 0
      %941 = vmatpush1.bf16.msra.mxu0 %v694
      %942 = vmatprep.subr.bf16.mxu0 0
      %943 = vmatpush1.bf16.msra.mxu0 %v695
      %944 = vmatprep.subr.bf16.mxu0 0
      %945 = vmatpush1.bf16.msra.mxu0 %v696
      %946 = vmatprep.subr.bf16.mxu0 0
      %947 = vmatpush1.bf16.msra.mxu0 %v697
      %948 = vmatprep.subr.bf16.mxu0 0
      %949 = vmatpush1.bf16.msra.mxu0 %v698
      %950 = vmatprep.subr.bf16.mxu0 0
      %951 = vmatpush1.bf16.msra.mxu0 %v699
      %952 = vmatprep.subr.bf16.mxu0 0
      %953 = vmatpush1.bf16.msra.mxu0 %v700
      %954 = vmatprep.subr.bf16.mxu0 0
      %955 = vmatpush1.bf16.msra.mxu0 %v701
      %956 = vmatprep.subr.bf16.mxu0 0
      %957 = vmatpush1.bf16.msra.mxu0 %v702
      %958 = vmatprep.subr.bf16.mxu0 0
      %959 = vmatpush1.bf16.msra.mxu0 %v703
      %960 = vmatprep.mubr.bf16.mxu0 %v247
      %961 = vmatmul.mubr.bf16.gmra.mrb[0].mxu0 %v246
      %v962 = vpop.f32.mrb[0].mxu0
      %v963 = vadd.f32 %v898, %v962
      %v964 = vpop.f32.mrb[0].mxu0
      %v965 = vpop.f32.mrb[0].mxu0
      %v966 = vadd.f32 %v901, %v965
      %v967 = vpop.f32.mrb[0].mxu0
      %968 = vmatprep.mubr.bf16.mxu0 %v255
      %969 = vmatmul.mubr.bf16.gmra.mrb[0].mxu0 %v254
      %v970 = vpop.f32.mrb[0].mxu0
      %v971 = vadd.f32 %v906, %v970
      %v972 = vpop.f32.mrb[0].mxu0
      %v973 = vpop.f32.mrb[0].mxu0
      %v974 = vadd.f32 %v909, %v973
      %v975 = vpop.f32.mrb[0].mxu0
      %976 = vmatprep.mubr.bf16.mxu0 %v263
      %977 = vmatmul.mubr.bf16.gmra.mrb[0].mxu0 %v262
      %v978 = vpop.f32.mrb[0].mxu0
      %v979 = vadd.f32 %v914, %v978
      %v980 = vpop.f32.mrb[0].mxu0
      %v981 = vpop.f32.mrb[0].mxu0
      %v982 = vadd.f32 %v917, %v981
      %v983 = vpop.f32.mrb[0].mxu0
      %984 = vmatprep.mubr.bf16.mxu0 %v271
      %985 = vmatmul.mubr.bf16.gmra.mrb[0].mxu0 %v270
      %v986 = vpop.f32.mrb[0].mxu0
      %v987 = vadd.f32 %v922, %v986
      %v988 = vpop.f32.mrb[0].mxu0
      %v989 = vpop.f32.mrb[0].mxu0
      %v990 = vadd.f32 %v925, %v989
      %v991 = vpop.f32.mrb[0].mxu0
      %992 = vdwg.mxu0
      %993 = vmatprep.subr.bf16.mxu0 0
      %994 = vmatpush1.bf16.msra.mxu0 %v704
      %995 = vmatprep.subr.bf16.mxu0 0
      %996 = vmatpush1.bf16.msra.mxu0 %v705
      %997 = vmatprep.subr.bf16.mxu0 0
      %998 = vmatpush1.bf16.msra.mxu0 %v706
      %999 = vmatprep.subr.bf16.mxu0 0
      %1000 = vmatpush1.bf16.msra.mxu0 %v707
      %1001 = vmatprep.subr.bf16.mxu0 0
      %1002 = vmatpush1.bf16.msra.mxu0 %v708
      %1003 = vmatprep.subr.bf16.mxu0 0
      %1004 = vmatpush1.bf16.msra.mxu0 %v709
      %1005 = vmatprep.subr.bf16.mxu0 0
      %1006 = vmatpush1.bf16.msra.mxu0 %v710
      %1007 = vmatprep.subr.bf16.mxu0 0
      %1008 = vmatpush1.bf16.msra.mxu0 %v711
      %1009 = vmatprep.subr.bf16.mxu0 0
      %1010 = vmatpush1.bf16.msra.mxu0 %v712
      %1011 = vmatprep.subr.bf16.mxu0 0
      %1012 = vmatpush1.bf16.msra.mxu0 %v713
      %1013 = vmatprep.subr.bf16.mxu0 0
      %1014 = vmatpush1.bf16.msra.mxu0 %v714
      %1015 = vmatprep.subr.bf16.mxu0 0
      %1016 = vmatpush1.bf16.msra.mxu0 %v715
      %1017 = vmatprep.subr.bf16.mxu0 0
      %1018 = vmatpush1.bf16.msra.mxu0 %v716
      %1019 = vmatprep.subr.bf16.mxu0 0
      %1020 = vmatpush1.bf16.msra.mxu0 %v717
      %1021 = vmatprep.subr.bf16.mxu0 0
      %1022 = vmatpush1.bf16.msra.mxu0 %v796
      %1023 = vmatprep.subr.bf16.mxu0 0
      %1024 = vmatpush1.bf16.msra.mxu0 0
      %1025 = vmatprep.mubr.bf16.mxu0 %v783
      %1026 = vmatmul.mubr.bf16.gmra.mrb[0].mxu0 %v248
      %v1027 = vpop.f32.mrb[0].mxu0
      %v1028 = vadd.f32 %v963, %v1027
      %v1029 = vpop.f32.mrb[0].mxu0
      %v1030 = vpop.f32.mrb[0].mxu0
      %v1031 = vadd.f32 %v966, %v1030
      %v1032 = vpop.f32.mrb[0].mxu0
      %1033 = vmatprep.mubr.bf16.mxu0 %v786
      %1034 = vmatmul.mubr.bf16.gmra.mrb[0].mxu0 %v256
      %v1035 = vpop.f32.mrb[0].mxu0
      %v1036 = vadd.f32 %v971, %v1035
      %v1037 = vpop.f32.mrb[0].mxu0
      %v1038 = vpop.f32.mrb[0].mxu0
      %v1039 = vadd.f32 %v974, %v1038
      %v1040 = vpop.f32.mrb[0].mxu0
      %1041 = vmatprep.mubr.bf16.mxu0 %v789
      %1042 = vmatmul.mubr.bf16.gmra.mrb[0].mxu0 %v264
      %v1043 = vpop.f32.mrb[0].mxu0
      %v1044 = vadd.f32 %v979, %v1043
      %v1045 = vpop.f32.mrb[0].mxu0
      %v1046 = vpop.f32.mrb[0].mxu0
      %v1047 = vadd.f32 %v982, %v1046
      %v1048 = vpop.f32.mrb[0].mxu0
      %1049 = vmatprep.mubr.bf16.mxu0 %v792
      %1050 = vmatmul.mubr.bf16.gmra.mrb[0].mxu0 %v272
      %v1051 = vpop.f32.mrb[0].mxu0
      %v1052 = vadd.f32 %v987, %v1051
      %v1053 = vpop.f32.mrb[0].mxu0
      %v1054 = vpop.f32.mrb[0].mxu0
      %v1055 = vadd.f32 %v990, %v1054
      %v1056 = vpop.f32.mrb[0].mxu0
      %1057 = vdwg.mxu0
      %1058 = vst [vmem:[%s175] sm:$0xff] %v1028
      %1059 = vst [vmem:[%s175 + $0x8] sm:$0xff] %v1031
      %1060 = vst [vmem:[%s175 + $0x10] sm:$0xff] %v1036
      %1061 = vst [vmem:[%s175 + $0x18] sm:$0xff] %v1039
      %1062 = vst [vmem:[%s175 + $0x20] sm:$0xff] %v1044
      %1063 = vst [vmem:[%s175 + $0x28] sm:$0xff] %v1047
      %1064 = vst [vmem:[%s175 + $0x30] sm:$0xff] %v1052
      %1065 = vst [vmem:[%s175 + $0x38] sm:$0xff] %v1055
      %s1066 = smul.u32 8, %s14
      %p1067 = scmp.lt.s32.totalorder %s1066, 15
      %s1068 = scalar_select %p1067, %s1066, 15
      %s1069 = smul.addr %s1068, 8
      %s1070 = scalar_lea.vmem %s3, %s1069
      // Predicated region
      $region33: #{_pallas_forward.1} parent=31 // pred_check
        %p1071 = pneg %p100
      $region34: #{_pallas_forward.1} parent=31 // pred_check_branch
        %1073 = sbr.rel (%p1071) target = $region36
      $region35: #{_pallas_forward.1} parent=31 // pred_region
        %s1074 = smul.u32 8, %s14
      $region36: #{_pallas_forward.1} parent=31 // pred_fallthru
        _
    $region32: #{_pallas_forward.1} parent=5 // pred_fallthru
      _
    %p1075 = scmp.le.s32.totalorder 2, %s9
    // Predicated region
    $region37: #{_pallas_forward.1} parent=5 // pred_check
      %p1076 = pneg %p1075
    $region38: #{_pallas_forward.1} parent=5 // pred_check_branch
      %1078 = sbr.rel (%p1076) target = $region40
    $region39: #{_pallas_forward.1} parent=5 // pred_region
      %s1079 = ssub.s32 %s9, 2
      // Predicated region
      $region41: #{_pallas_forward.1} parent=39 // pred_check
        %p1080 = pneg %p106
      $region42: #{_pallas_forward.1} parent=39 // pred_check_branch
        %1082 = sbr.rel (%p1080) target = $region44
      $region43: #{_pallas_forward.1} parent=39 // pred_region
        %s1083 = smul.u32 8, %s15
        %p1084 = scmp.lt.s32.totalorder %s1083, 15
        %s1085 = scalar_select %p1084, %s1083, 15
        %s1086 = smul.addr %s1085, 8
        %s1087 = scalar_lea.vmem %s3, %s1086
      $region44: #{_pallas_forward.1} parent=39 // pred_fallthru
        _
    $region40: #{_pallas_forward.1} parent=5 // pred_fallthru
      _
  $region6: #{_pallas_forward.1} parent=0 // loop_footer
    %s13 = sadd.s32 1, %s9
  $region7: #{_pallas_forward.1} parent=0 // loop_footer_branch
    %8 = sbr.rel target = $region3
  $region8: #{_pallas_forward.1} parent=0 // loop_exit
    _

</llo_original>
